<compile_context>
chip_gen: v7x
topology: tpu7x:2x2x1
jax: 0.10.0
libtpu: 0.0.40
codegen_flags: <defaults>
</compile_context>

<pallas_src>
import math
from functools import partial

import numpy as np
import jax
import jax.numpy as jnp
from jax.experimental import pallas as pl
from jax.experimental.pallas import tpu as pltpu

NEG = -3.0e38                      # representable in bf16 (same exponent range as f32)
_VMEM_LIMIT = 32 * 1024 * 1024     # explicit scoped-VMEM limit (fits v5e/v6e/v7x physical VMEM)


def _round_up(x, m):
    return ((x + m - 1) // m) * m


# ----------------------------------------------------------------------------
# Kernel 1: fused Linear (+ BN/ReLU prologue), three epilogue variants
# ----------------------------------------------------------------------------

def _linear_body(x_ref, w_ref, b_ref, insc_ref, insh_ref, *, prologue, small_k):
    x = x_ref[...]
    if prologue:
        # previous layer's BatchNorm-apply (or identity) + ReLU fused as this matmul's prologue
        x = jnp.maximum(x.astype(jnp.float32) * insc_ref[...] + insh_ref[...], 0.0)
    if small_k:
        # tiny-K first layer (Cin <= 8): VPU broadcast-FMA; keeps the HBM input lane-dense
        # instead of padding K to 128 (which would 32x the input read).
        xf = x.astype(jnp.float32)
        w = w_ref[...]
        acc = xf[:, 0:1] * w[0:1, :]
        for k in range(1, xf.shape[1]):
            acc = acc + xf[:, k:k + 1] * w[k:k + 1, :]
    else:
        # bf16 MXU matmul, f32 accumulation
        acc = jnp.dot(x.astype(jnp.bfloat16), w_ref[...],
                      preferred_element_type=jnp.float32)
    return acc + b_ref[...]


def _linear_plain_kernel(x_ref, w_ref, b_ref, insc_ref, insh_ref, mask_ref, o_ref,
                         *, prologue, small_k, neg_invalid):
    o = _linear_body(x_ref, w_ref, b_ref, insc_ref, insh_ref,
                     prologue=prologue, small_k=small_k)
    if neg_invalid:
        # invalid / padded message rows get NEG so the neighbor-max kernel needs no mask stream
        o = jnp.where(mask_ref[...] > 0.5, o, NEG)
    o_ref[...] = o.astype(o_ref.dtype)


def _linear_stats_kernel(x_ref, w_ref, b_ref, insc_ref, insh_ref, mask_ref,
                         o_ref, stat_ref, *, prologue, small_k):
    o = _linear_body(x_ref, w_ref, b_ref, insc_ref, insh_ref,
                     prologue=prologue, small_k=small_k)
    o_ref[...] = o.astype(o_ref.dtype)
    # per-row-tile partial BN statistics (row 0 = masked column sum, row 1 = masked sum of squares)
    om = o * mask_ref[...]
    sumv = jnp.sum(om, axis=0, keepdims=True)
    sqv = jnp.sum(om * o, axis=0, keepdims=True)
    ridx = jax.lax.broadcasted_iota(jnp.int32, stat_ref.shape, 0)
    stat_ref[...] = jnp.where(ridx == 0, sumv, jnp.where(ridx == 1, sqv, 0.0))


def _linear_segmax_kernel(x_ref, w_ref, b_ref, insc_ref, insh_ref, gmask_ref,
                          seg_ref, *, prologue, small_k, n_groups):
    o = _linear_body(x_ref, w_ref, b_ref, insc_ref, insh_ref,
                     prologue=prologue, small_k=small_k)
    gm = gmask_ref[...]                                   # (tm, B)
    seg_ref[...] = jnp.full(seg_ref.shape, NEG, jnp.float32)
    for g in range(n_groups):                             # direct per-group row writes
        sel = jnp.where(gm[:, g:g + 1] > 0.5, o, NEG)
        seg_ref[g:g + 1, :] = jnp.max(sel, axis=0, keepdims=True)


@partial(jax.jit, static_argnames=("prologue", "small_k", "tm", "mode",
                                   "n_groups", "neg_invalid", "out_bf16"))
def _fused_linear(x, w, b, insc, insh, mask, *, prologue, small_k, tm,
                  mode="plain", n_groups=0, neg_invalid=False, out_bf16=True):
    Rp, Kx = x.shape
    Np = w.shape[1]
    # full output width per tile when it fits comfortably in VMEM: W stays resident,
    # x is read (and the prologue recomputed) exactly once per row tile.
    if Np <= 1024:
        tn = Np
    elif Np % 1024 == 0:
        tn = 1024
    elif Np % 512 == 0:
        tn = 512
    elif Np % 256 == 0:
        tn = 256
    else:
        tn = 128
    cj, ri = Np // tn, Rp // tm
    out_dtype = jnp.bfloat16 if out_bf16 else jnp.float32

    in_specs = [
        pl.BlockSpec((tm, Kx), lambda j, i: (i, 0)),
        pl.BlockSpec((Kx, tn), lambda j, i: (0, j)),
        pl.BlockSpec((1, tn), lambda j, i: (0, j)),
        pl.BlockSpec((1, Kx), lambda j, i: (0, 0)),
        pl.BlockSpec((1, Kx), lambda j, i: (0, 0)),
    ]
    cp = pltpu.CompilerParams(dimension_semantics=("parallel", "parallel"),
                              vmem_limit_bytes=_VMEM_LIMIT)

    if mode == "plain":
        kernel = partial(_linear_plain_kernel, prologue=prologue,
                         small_k=small_k, neg_invalid=neg_invalid)
        in_specs.append(pl.BlockSpec((tm, 1), lambda j, i: (i, 0)))
        return pl.pallas_call(
            kernel,
            out_shape=jax.ShapeDtypeStruct((Rp, Np), out_dtype),
            grid=(cj, ri),
            in_specs=in_specs,
            out_specs=pl.BlockSpec((tm, tn), lambda j, i: (i, j)),
            compiler_params=cp,
        )(x, w, b, insc, insh, mask)

    if mode == "stats":
        kernel = partial(_linear_stats_kernel, prologue=prologue, small_k=small_k)
        in_specs.append(pl.BlockSpec((tm, 1), lambda j, i: (i, 0)))
        return pl.pallas_call(
            kernel,
            out_shape=(jax.ShapeDtypeStruct((Rp, Np), out_dtype),
                       jax.ShapeDtypeStruct((ri * 8, Np), jnp.float32)),
            grid=(cj, ri),
            in_specs=in_specs,
            out_specs=(pl.BlockSpec((tm, tn), lambda j, i: (i, j)),
                       pl.BlockSpec((8, tn), lambda j, i: (i, j))),
            compiler_params=cp,
        )(x, w, b, insc, insh, mask)

    # mode == "segmax": fused global scatter_max, per-row-tile partial (Bp, tn) maxima
    ncols = mask.shape[1]
    Bp = _round_up(max(n_groups, 1), 8)
    kernel = partial(_linear_segmax_kernel, prologue=prologue, small_k=small_k,
                     n_groups=n_groups)
    in_specs.append(pl.BlockSpec((tm, ncols), lambda j, i: (i, 0)))
    return pl.pallas_call(
        kernel,
        out_shape=jax.ShapeDtypeStruct((ri * Bp, Np), jnp.float32),
        grid=(cj, ri),
        in_specs=in_specs,
        out_specs=pl.BlockSpec((Bp, tn), lambda j, i: (i, j)),
        compiler_params=cp,
    )(x, w, b, insc, insh, mask)


# ----------------------------------------------------------------------------
# Kernel 2: per-target max over K neighbors (PointNetConv aggr='max'), unmasked
# ----------------------------------------------------------------------------

def _neighbor_max_kernel(msg_ref, o_ref):
    o_ref[...] = jnp.max(msg_ref[...], axis=1)


@jax.jit
def _neighbor_max(msg3):
    Mp, K, Cp = msg3.shape
    tmm = 8
    for cand in (64, 32, 16, 8):                 # largest row tile dividing Mp, capped at 64
        if Mp % cand == 0:
            tmm = cand
            break
    return pl.pallas_call(
        _neighbor_max_kernel,
        out_shape=jax.ShapeDtypeStruct((Mp, Cp), msg3.dtype),
        grid=(Mp // tmm,),
        in_specs=[pl.BlockSpec((tmm, K, Cp), lambda i: (i, 0, 0))],
        out_specs=pl.BlockSpec((tmm, Cp), lambda i: (i, 0)),
        compiler_params=pltpu.CompilerParams(
            dimension_semantics=("parallel",),
            vmem_limit_bytes=_VMEM_LIMIT),
    )(msg3)


# ----------------------------------------------------------------------------
# MLP (PyG-style: Linear -> BatchNorm(batch stats) -> ReLU, plain last layer)
# ----------------------------------------------------------------------------

def init_mlp(key, channels, norm=True):
    n = len(channels) - 1
    keys = jax.random.split(key, n)
    layers = []
    for i in range(n):
        cin, cout = channels[i], channels[i + 1]
        wk, bk = jax.random.split(keys[i])
        W = jax.random.normal(wk, (cin, cout), jnp.float32) / np.sqrt(cin)
        b = jax.random.normal(bk, (cout,), jnp.float32) * 0.01
        small_k = cin <= 8
        kp = cin if small_k else _round_up(cin, 128)
        npad = _round_up(cout, 128)
        Wp = jnp.pad(W, ((0, kp - cin), (0, npad - cout)))
        if not small_k:
            Wp = Wp.astype(jnp.bfloat16)         # bf16 MXU operand
        bp = jnp.pad(b, (0, npad - cout)).reshape(1, npad)
        layers.append(dict(
            w=Wp, b=bp,
            gamma=jnp.ones((cout,), jnp.float32),
            beta=jnp.zeros((cout,), jnp.float32),
            cin=cin, cout=cout, kp=kp, np=npad,
            small_k=small_k, has_norm=(norm and i < n - 1), last=(i == n - 1)))
    return {"layers": layers}


def mlp_forward(p, x, row_mask=None, return_padded=False,
                last_mode="plain", gmask=None, num_groups=0):
    """Hidden layers: Linear -> BatchNorm(batch stats over masked rows) -> ReLU;
    plain last layer.  BN-apply + ReLU of layer i are fused into layer i+1's linear kernel as a
    prologue; BN statistics come from per-row-tile partial sums emitted by the linear kernel.

    last_mode:
      "plain"  -> return the last layer's activations,
      "neg"    -> last layer writes NEG into rows with row_mask==0 (feeds the neighbor-max kernel),
      "segmax" -> last layer fused with a per-group (scatter) max over `gmask`; returns (B, cout).
    """
    layers = p["layers"]
    R, C0 = x.shape
    assert C0 == layers[0]["cin"]
    Rp8 = _round_up(R, 8)
    tm = Rp8 if Rp8 <= 256 else 256
    Rp = _round_up(Rp8, tm)
    ri = Rp // tm

    if row_mask is None:
        rm = (jnp.arange(Rp) < R).astype(jnp.float32)
    else:
        rm = jnp.pad(row_mask.astype(jnp.float32), (0, Rp - R))
    maskp = rm.reshape(Rp, 1)
    cnt = jnp.maximum(jnp.sum(rm), 1.0)

    L0 = layers[0]
    # bf16 inter-layer activations; first-layer input pre-cast to bf16 for MXU layers
    xin = x.astype(jnp.float32) if L0["small_k"] else x.astype(jnp.bfloat16)
    h = jnp.pad(xin, ((0, Rp - R), (0, L0["kp"] - C0)))
    insc = jnp.zeros((1, L0["kp"]), jnp.float32)
    insh = jnp.zeros((1, L0["kp"]), jnp.float32)
    prologue = False

    for L in layers:
        if L["last"] and last_mode == "segmax":
            gmp = jnp.pad(gmask.astype(jnp.float32), ((0, Rp - R), (0, 0)))
            seg = _fused_linear(h, L["w"], L["b"], insc, insh, gmp,
                                prologue=prologue, small_k=L["small_k"], tm=tm,
                                mode="segmax", n_groups=num_groups)
            Bp = seg.shape[0] // ri
            seg = jnp.max(seg.reshape(ri, Bp, -1), axis=0)   # reduce the per-row-tile partials
            return seg[:num_groups, :L["cout"]]

        if L["has_norm"]:
            h, stat = _fused_linear(h, L["w"], L["b"], insc, insh, maskp,
                                    prologue=prologue, small_k=L["small_k"], tm=tm,
                                    mode="stats")
            stat = stat.reshape(ri, 8, -1)
            psum = jnp.sum(stat[:, 0, :], axis=0)
            psq = jnp.sum(stat[:, 1, :], axis=0)
            cout, npad = L["cout"], L["np"]
            mean = psum[:cout] / cnt
            var = jnp.maximum(psq[:cout] / cnt - mean * mean, 0.0)
            scale = L["gamma"] / jnp.sqrt(var + 1e-5)
            shift = L["beta"] - mean * scale
        else:
            neg = L["last"] and last_mode == "neg"
            out_bf16 = (not L["last"]) or neg   # bf16 when consumed by another Pallas kernel
            h = _fused_linear(h, L["w"], L["b"], insc, insh, maskp,
                              prologue=prologue, small_k=L["small_k"], tm=tm,
                              mode="plain", neg_invalid=neg, out_bf16=out_bf16)
            if L["last"]:
                break
            cout, npad = L["cout"], L["np"]
            scale = jnp.ones((cout,), jnp.float32)     # plain Linear -> ReLU (head MLP, norm=None)
            shift = jnp.zeros((cout,), jnp.float32)
            # TODO(synk): dropout (p=0.5 in the head MLP) treated as identity (eval semantics).

        insc = jnp.pad(scale, (0, npad - cout)).reshape(1, npad)
        insh = jnp.pad(shift, (0, npad - cout)).reshape(1, npad)
        prologue = True

    cout = layers[-1]["cout"]
    if return_padded:
        return h, cout
    return h[:R, :cout].astype(jnp.float32)


# ----------------------------------------------------------------------------
# Graph glue: FPS sampling, radius neighbor search (plain JAX, data dependent)
# ----------------------------------------------------------------------------

def fps(pos, counts, ratio):
    """Farthest point sampling per graph (deterministic start at first point).
    TODO(synk): torch_cluster fps uses random_start=True; deterministic start used here."""
    idx_list, counts_out, offset = [], [], 0
    for c in counts:
        n_s = max(1, int(math.ceil(ratio * c)))
        seg = pos[offset:offset + c]
        sel = [jnp.array(0, jnp.int32)]
        d = jnp.sum((seg - seg[0]) ** 2, axis=-1)
        for _ in range(n_s - 1):
            nxt = jnp.argmax(d).astype(jnp.int32)
            sel.append(nxt)
            d = jnp.minimum(d, jnp.sum((seg - seg[nxt]) ** 2, axis=-1))
        idx_list.append(jnp.stack(sel) + offset)
        counts_out.append(n_s)
        offset += c
    return jnp.concatenate(idx_list), counts_out


def radius_neighbors(pos_src, pos_dst, r, batch_src, batch_dst, max_num_neighbors=64):
    """Per dst point: up to K src indices within radius r and in the same graph."""
    n_src = pos_src.shape[0]
    K = min(max_num_neighbors, n_src)
    d2 = jnp.sum((pos_dst[:, None, :] - pos_src[None, :, :]) ** 2, axis=-1)
    mask = (d2 <= r * r) & (batch_dst[:, None] == batch_src[None, :])
    ar = jnp.arange(n_src)
    sort_key = jnp.where(mask, ar[None, :], n_src + ar[None, :])
    order = jnp.argsort(sort_key, axis=1)[:, :K]
    nbr_valid = jnp.take_along_axis(mask, order, axis=1)
    return order, nbr_valid


def pointnet_conv_max(mlp_params, x_src, pos_src, pos_dst, nbr_idx, nbr_valid):
    """PointNetConv(local_nn=MLP, aggr='max'): message = MLP([x_j, pos_j - pos_i]),
    max over the valid neighbors of each target point."""
    M, K = nbr_idx.shape
    Mp = _round_up(M, 8)
    nbr_idx = jnp.pad(nbr_idx, ((0, Mp - M), (0, 0)))
    nbr_valid = jnp.pad(nbr_valid, ((0, Mp - M), (0, 0)))
    pos_dst_p = jnp.pad(pos_dst, ((0, Mp - M), (0, 0)))

    # TODO(synk): neighbor gather + concat still materialized in plain JAX; fusing the gather
    # into the first linear layer via scalar-prefetched nbr_idx is a further bandwidth win.
    x_j = x_src[nbr_idx]                                   # (Mp, K, Cx)
    rel = pos_src[nbr_idx] - pos_dst_p[:, None, :]         # (Mp, K, 3)
    feats = jnp.concatenate([x_j, rel], axis=-1).reshape(Mp * K, -1)
    row_mask = nbr_valid.reshape(Mp * K)

    # last MLP layer writes NEG into invalid rows -> unmasked neighbor max
    msg_p, cout = mlp_forward(mlp_params, feats, row_mask=row_mask,
                              return_padded=True, last_mode="neg")   # (Rp, Cp) bf16
    Cp = msg_p.shape[1]
    msg3 = msg_p[:Mp * K].reshape(Mp, K, Cp)
    nm = _neighbor_max(msg3)                               # (Mp, Cp) bf16
    any_valid = jnp.any(nbr_valid, axis=1)
    out = jnp.where(any_valid[:, None], nm.astype(jnp.float32), 0.0)  # no-neighbor targets -> 0
    return out[:M, :cout]


def sa_module_msg(conv_params_list, radius_list, ratio, x, pos, batch_vec, counts):
    idx, counts_out = fps(pos, counts, ratio)
    pos_dst = pos[idx]
    batch_dst = batch_vec[idx]
    outs = []
    for p_mlp, r in zip(conv_params_list, radius_list):
        nbr_idx, nbr_valid = radius_neighbors(pos, pos_dst, r, batch_vec, batch_dst, 64)
        outs.append(pointnet_conv_max(p_mlp, x, pos, pos_dst, nbr_idx, nbr_valid))
    return jnp.concatenate(outs, axis=1), pos_dst, batch_dst, counts_out


# ----------------------------------------------------------------------------
# PointNetMSG forward
# ----------------------------------------------------------------------------

def init_params(key):
    ks = jax.random.split(key, 10)
    return {
        "tnet_mlp1": init_mlp(ks[0], [4, 64, 128, 1024]),
        "tnet_mlp2": init_mlp(ks[1], [1024, 512, 256, 9]),
        "sa1": [init_mlp(ks[2], [1 + 3, 32, 32, 64]),
                init_mlp(ks[3], [1 + 3, 64, 64, 128]),
                init_mlp(ks[4], [1 + 3, 64, 96, 128])],
        "sa2": [init_mlp(ks[5], [320 + 3, 64, 64, 128]),
                init_mlp(ks[6], [320 + 3, 128, 128, 256]),
                init_mlp(ks[7], [320 + 3, 128, 128, 256])],
        "sa3": init_mlp(ks[8], [640 + 3, 256, 512, 1024]),
        "final": init_mlp(ks[9], [1024, 512, 256, 1], norm=False),
    }


def pointnet_msg_forward(params, x, pos, batch_vec, counts):
    B = len(counts)
    N = pos.shape[0]

    # ---- TNet3dpos ----
    tin = jnp.concatenate([pos, x], axis=1)                          # (N, 4)
    gmask = (batch_vec[:, None] == jnp.arange(B)[None, :]).astype(jnp.float32)
    # scatter_max fused into the last layer of mlp1 (no (N, 1024) HBM round-trip)
    g = mlp_forward(params["tnet_mlp1"], tin, last_mode="segmax",
                    gmask=gmask, num_groups=B)                       # (B, 1024)
    g = mlp_forward(params["tnet_mlp2"], g)                          # (B, 9)
    identity = jnp.array([1, 0, 0, 0, 1, 0, 0, 0, 1], jnp.float32)
    tmat = (g[batch_vec] + identity[None, :]).reshape(N, 3, 3)
    # per-point 1x3 @ 3x3 (torch.bmm): negligible work, lane-sparse -> plain JAX
    pos_t = jnp.einsum("ni,nij->nj", pos, tmat)

    # ---- SA1 / SA2 (multi-scale grouping) ----
    x1, pos1, batch1, counts1 = sa_module_msg(
        params["sa1"], [1.0, 2.0, 4.0], 0.25, x, pos_t, batch_vec, counts)
    x2, pos2, batch2, counts2 = sa_module_msg(
        params["sa2"], [2.0, 4.0, 8.0], 0.5, x1, pos1, batch1, counts1)

    # ---- Global SA (scatter_max fused into the last layer of the sa3 MLP) ----
    gmask2 = (batch2[:, None] == jnp.arange(B)[None, :]).astype(jnp.float32)
    g3 = mlp_forward(params["sa3"], jnp.concatenate([x2, pos2], axis=1),
                     last_mode="segmax", gmask=gmask2, num_groups=B)  # (B, 1024)

    # ---- final MLP ([1024, 512, 256, 1], norm=None, dropout treated as identity) ----
    return mlp_forward(params["final"], g3)                           # (B, 1)


if __name__ == "__main__":
    key = jax.random.PRNGKey(0)
    k_pos, k_x, k_par = jax.random.split(key, 3)

    counts = [16, 16]                      # 2 graphs, 16 points each
    N = sum(counts)
    pos = jax.random.normal(k_pos, (N, 3), jnp.float32)
    x = jax.random.normal(k_x, (N, 1), jnp.float32)
    batch_vec = jnp.concatenate(
        [jnp.full((c,), i, jnp.int32) for i, c in enumerate(counts)])

    params = init_params(k_par)
    out = pointnet_msg_forward(params, x, pos, batch_vec, counts)
    out = jax.block_until_ready(out)
    assert out.shape == (len(counts), 1)
    assert bool(jnp.all(jnp.isfinite(out)))
    print("KERNEL_OK")
</pallas_src>

<mosaic_0001>
module attributes {stable_mosaic.version = 11 : i64} {
  func.func @_linear_stats_kernel(%arg0: i32, %arg1: i32, %arg2: memref<32x4xf32, #tpu.memory_space<vmem>>, %arg3: memref<4x128xf32, #tpu.memory_space<vmem>>, %arg4: memref<1x128xf32, #tpu.memory_space<vmem>>, %arg5: memref<1x4xf32, #tpu.memory_space<vmem>>, %arg6: memref<1x4xf32, #tpu.memory_space<vmem>>, %arg7: memref<32x1xf32, #tpu.memory_space<vmem>>, %arg8: memref<32x128xbf16, #tpu.memory_space<vmem>>, %arg9: memref<8x128xf32, #tpu.memory_space<vmem>>) attributes {dimension_semantics = [#tpu.dimension_semantics<parallel>, #tpu.dimension_semantics<parallel>], iteration_bounds = array<i64: 1, 1>, scalar_prefetch = 0 : i64, scratch_operands = 0 : i64, tpu.core_type = #tpu.core_type<tc>, window_params = [{transform_indices = @transform_0, window_bounds = array<i64: 32, 4>}, {transform_indices = @transform_1, window_bounds = array<i64: 4, 128>}, {transform_indices = @transform_2, window_bounds = array<i64: 1, 128>}, {pipeline_mode = #tpu.pipeline_mode<synchronous>, transform_indices = @transform_3, window_bounds = array<i64: 1, 4>}, {pipeline_mode = #tpu.pipeline_mode<synchronous>, transform_indices = @transform_4, window_bounds = array<i64: 1, 4>}, {transform_indices = @transform_5, window_bounds = array<i64: 32, 1>}, {transform_indices = @transform_6, window_bounds = array<i64: 32, 128>}, {transform_indices = @transform_7, window_bounds = array<i64: 8, 128>}]} {
    %c0 = arith.constant 0 : index
    %c0_0 = arith.constant 0 : index
    %0 = vector.load %arg2[%c0, %c0_0] : memref<32x4xf32, #tpu.memory_space<vmem>>, vector<32x4xf32>
    %c0_1 = arith.constant 0 : index
    %c0_2 = arith.constant 0 : index
    %1 = vector.load %arg3[%c0_1, %c0_2] : memref<4x128xf32, #tpu.memory_space<vmem>>, vector<4x128xf32>
    %2 = vector.extract_strided_slice %0 {offsets = [0, 0], sizes = [32, 1], strides = [1, 1]} : vector<32x4xf32> to vector<32x1xf32>
    %3 = vector.extract_strided_slice %1 {offsets = [0, 0], sizes = [1, 128], strides = [1, 1]} : vector<4x128xf32> to vector<1x128xf32>
    %4 = vector.broadcast %2 : vector<32x1xf32> to vector<32x128xf32>
    %5 = vector.broadcast %3 : vector<1x128xf32> to vector<32x128xf32>
    %6 = arith.mulf %4, %5 : vector<32x128xf32>
    %7 = vector.extract_strided_slice %0 {offsets = [0, 1], sizes = [32, 1], strides = [1, 1]} : vector<32x4xf32> to vector<32x1xf32>
    %8 = vector.extract_strided_slice %1 {offsets = [1, 0], sizes = [1, 128], strides = [1, 1]} : vector<4x128xf32> to vector<1x128xf32>
    %9 = vector.broadcast %7 : vector<32x1xf32> to vector<32x128xf32>
    %10 = vector.broadcast %8 : vector<1x128xf32> to vector<32x128xf32>
    %11 = arith.mulf %9, %10 : vector<32x128xf32>
    %12 = arith.addf %6, %11 : vector<32x128xf32>
    %13 = vector.extract_strided_slice %0 {offsets = [0, 2], sizes = [32, 1], strides = [1, 1]} : vector<32x4xf32> to vector<32x1xf32>
    %14 = vector.extract_strided_slice %1 {offsets = [2, 0], sizes = [1, 128], strides = [1, 1]} : vector<4x128xf32> to vector<1x128xf32>
    %15 = vector.broadcast %13 : vector<32x1xf32> to vector<32x128xf32>
    %16 = vector.broadcast %14 : vector<1x128xf32> to vector<32x128xf32>
    %17 = arith.mulf %15, %16 : vector<32x128xf32>
    %18 = arith.addf %12, %17 : vector<32x128xf32>
    %19 = vector.extract_strided_slice %0 {offsets = [0, 3], sizes = [32, 1], strides = [1, 1]} : vector<32x4xf32> to vector<32x1xf32>
    %20 = vector.extract_strided_slice %1 {offsets = [3, 0], sizes = [1, 128], strides = [1, 1]} : vector<4x128xf32> to vector<1x128xf32>
    %21 = vector.broadcast %19 : vector<32x1xf32> to vector<32x128xf32>
    %22 = vector.broadcast %20 : vector<1x128xf32> to vector<32x128xf32>
    %23 = arith.mulf %21, %22 : vector<32x128xf32>
    %24 = arith.addf %18, %23 : vector<32x128xf32>
    %c0_3 = arith.constant 0 : index
    %c0_4 = arith.constant 0 : index
    %25 = vector.load %arg4[%c0_3, %c0_4] : memref<1x128xf32, #tpu.memory_space<vmem>>, vector<1x128xf32>
    %26 = vector.broadcast %25 : vector<1x128xf32> to vector<32x128xf32>
    %27 = arith.addf %24, %26 : vector<32x128xf32>
    %28 = arith.truncf %27 : vector<32x128xf32> to vector<32x128xbf16>
    %c0_5 = arith.constant 0 : index
    %c0_6 = arith.constant 0 : index
    %29 = vector.load %arg8[%c0_5, %c0_6] : memref<32x128xbf16, #tpu.memory_space<vmem>>, vector<32x128xbf16>
    tpu.vector_store %arg8[%c0_5, %c0_6], %28 {strides = array<i32>} : memref<32x128xbf16, #tpu.memory_space<vmem>>, vector<32x128xbf16>,
    %c0_7 = arith.constant 0 : index
    %c0_8 = arith.constant 0 : index
    %30 = vector.load %arg7[%c0_7, %c0_8] : memref<32x1xf32, #tpu.memory_space<vmem>>, vector<32x1xf32>
    %31 = vector.broadcast %30 : vector<32x1xf32> to vector<32x128xf32>
    %32 = arith.mulf %27, %31 : vector<32x128xf32>
    %cst = arith.constant dense<0.000000e+00> : vector<128xf32>
    %33 = vector.multi_reduction <add>, %32, %cst [0] : vector<32x128xf32> to vector<128xf32>
    %34 = vector.shape_cast %33 : vector<128xf32> to vector<1x128xf32>
    %35 = arith.mulf %32, %27 : vector<32x128xf32>
    %cst_9 = arith.constant dense<0.000000e+00> : vector<128xf32>
    %36 = vector.multi_reduction <add>, %35, %cst_9 [0] : vector<32x128xf32> to vector<128xf32>
    %37 = vector.shape_cast %36 : vector<128xf32> to vector<1x128xf32>
    %38 = tpu.iota {dimensions = array<i32: 0>} : vector<8x128xi32>
    %c0_i32 = arith.constant 0 : i32
    %39 = vector.broadcast %c0_i32 : i32 to vector<8x128xi32>
    %40 = arith.cmpi eq, %38, %39 : vector<8x128xi32>
    %c1_i32 = arith.constant 1 : i32
    %41 = vector.broadcast %c1_i32 : i32 to vector<8x128xi32>
    %42 = arith.cmpi eq, %38, %41 : vector<8x128xi32>
    %cst_10 = arith.constant 0.000000e+00 : f32
    %43 = vector.shape_cast %37 : vector<1x128xf32> to vector<1x128xf32>
    %44 = vector.broadcast %43 : vector<1x128xf32> to vector<8x128xf32>
    %45 = vector.broadcast %cst_10 : f32 to vector<8x128xf32>
    %46 = arith.select %42, %44, %45 : vector<8x128xi1>, vector<8x128xf32>
    %47 = vector.shape_cast %34 : vector<1x128xf32> to vector<1x128xf32>
    %48 = vector.broadcast %47 : vector<1x128xf32> to vector<8x128xf32>
    %49 = arith.select %40, %48, %46 : vector<8x128xi1>, vector<8x128xf32>
    %c0_11 = arith.constant 0 : index
    %c0_12 = arith.constant 0 : index
    %50 = vector.load %arg9[%c0_11, %c0_12] : memref<8x128xf32, #tpu.memory_space<vmem>>, vector<8x128xf32>
    tpu.vector_store %arg9[%c0_11, %c0_12], %49 {strides = array<i32>} : memref<8x128xf32, #tpu.memory_space<vmem>>, vector<8x128xf32>,
    return
  }
  func.func @transform_0(%arg0: i32, %arg1: i32) -> (i32, i32) {
    %c0_i32 = arith.constant 0 : i32
    %c0_i32_0 = arith.constant 0 : i32
    return %arg1, %c0_i32 : i32, i32
  }
  func.func @transform_1(%arg0: i32, %arg1: i32) -> (i32, i32) {
    %c0_i32 = arith.constant 0 : i32
    %c0_i32_0 = arith.constant 0 : i32
    return %c0_i32, %arg0 : i32, i32
  }
  func.func @transform_2(%arg0: i32, %arg1: i32) -> (i32, i32) {
    %c0_i32 = arith.constant 0 : i32
    %c0_i32_0 = arith.constant 0 : i32
    return %c0_i32, %arg0 : i32, i32
  }
  func.func @transform_3(%arg0: i32, %arg1: i32) -> (i32, i32) {
    %c0_i32 = arith.constant 0 : i32
    %c0_i32_0 = arith.constant 0 : i32
    %c0_i32_1 = arith.constant 0 : i32
    return %c0_i32, %c0_i32_0 : i32, i32
  }
  func.func @transform_4(%arg0: i32, %arg1: i32) -> (i32, i32) {
    %c0_i32 = arith.constant 0 : i32
    %c0_i32_0 = arith.constant 0 : i32
    %c0_i32_1 = arith.constant 0 : i32
    return %c0_i32, %c0_i32_0 : i32, i32
  }
  func.func @transform_5(%arg0: i32, %arg1: i32) -> (i32, i32) {
    %c0_i32 = arith.constant 0 : i32
    %c0_i32_0 = arith.constant 0 : i32
    return %arg1, %c0_i32 : i32, i32
  }
  func.func @transform_6(%arg0: i32, %arg1: i32) -> (i32, i32) {
    %c0_i32 = arith.constant 0 : i32
    return %arg1, %arg0 : i32, i32
  }
  func.func @transform_7(%arg0: i32, %arg1: i32) -> (i32, i32) {
    %c0_i32 = arith.constant 0 : i32
    return %arg1, %arg0 : i32, i32
  }
}

</mosaic_0001>

<llo_original>
// kernel: _fused_linear.1
$region0: #{_fused_linear.1}
  #allocation0 [shape = 'u32[]', space=smem, size = 0x4, offset = 0x4, fixed_abs, tag = 'smem constant byte address 0x4 - core index']
  #allocation1 [shape = 'u32[144,128]{1,0:T(1,128)}', space=vmem, size = 0x12000, scoped, tag = 'internal scratch']
  %s0 = inlined_call_operand.vmem [shape: f32[32,4], index: 0, kind: input, shape index: {}]
  %s1 = inlined_call_operand.vmem [shape: f32[4,128], index: 1, kind: input, shape index: {}]
  %s2 = inlined_call_operand.vmem [shape: f32[1,128], index: 2, kind: input, shape index: {}]
  %s3 = inlined_call_operand.vmem [shape: f32[1,4], index: 3, kind: input, shape index: {}]
  %s4 = inlined_call_operand.vmem [shape: f32[1,4], index: 4, kind: input, shape index: {}]
  %s5 = inlined_call_operand.vmem [shape: f32[32,1], index: 5, kind: input, shape index: {}]
  %s6 = inlined_call_operand.hbm [shape: bf16[32,128], index: 6, kind: output, shape index: {0}]
  %s7 = inlined_call_operand.hbm [shape: f32[8,128], index: 7, kind: output, shape index: {1}]
  %8 = xla_tuple %s6, %s7
  %s9 = sld [smem:[#allocation0]]
  $region42: #{_fused_linear.1} parent=0
    _
  %s11 = ssub.s32 1, %s9
  %s12 = scalar_select 0, %s11, %s9
  $region1: #{_fused_linear.1} parent=0
    #allocation2 [shape = 'u8[8192]{0}', space=vmem, size = 0x2000, scoped, tag = 'output window, operand 0, single buffered']
    #allocation3 [shape = 's32[1]{0}', space=sflag, size = 0x4, scoped, tag = 'scoped memory for _fused_linear.1']
    #allocation4 [shape = 'u8[4096]{0}', space=vmem, size = 0x1000, scoped, tag = 'output window, operand 1, single buffered']
    #allocation5 [shape = 's32[1]{0}', space=sflag, size = 0x4, scoped, tag = 'scoped memory for _fused_linear.1']
    %13 = vsyncpa [#allocation3], 0
    %14 = vsyncpa [#allocation5], 0
    // Predicated region
    $region2: #{_fused_linear.1} parent=1 // pred_check
      _
    $region3: #{_fused_linear.1} parent=1 // pred_check_branch
      %16 = sbr.rel (0) target = $region5
    $region4: #{_fused_linear.1} parent=1 // pred_region
      _
    $region5: #{_fused_linear.1} parent=1 // pred_fallthru
      _
    // Predicated region
    $region6: #{_fused_linear.1} parent=1 // pred_check
      _
    $region7: #{_fused_linear.1} parent=1 // pred_check_branch
      %18 = sbr.rel (0) target = $region9
    $region8: #{_fused_linear.1} parent=1 // pred_region
      _
    $region9: #{_fused_linear.1} parent=1 // pred_fallthru
      _
    // Predicated region
    $region10: #{_fused_linear.1} parent=1 // pred_check
      _
    $region11: #{_fused_linear.1} parent=1 // pred_check_branch
      %20 = sbr.rel (0) target = $region13
    $region12: #{_fused_linear.1} parent=1 // pred_region
      _
    $region13: #{_fused_linear.1} parent=1 // pred_fallthru
      _
    // Predicated region
    $region14: #{_fused_linear.1} parent=1 // pred_check
      _
    $region15: #{_fused_linear.1} parent=1 // pred_check_branch
      %22 = sbr.rel (0) target = $region17
    $region16: #{_fused_linear.1} parent=1 // pred_region
      _
    $region17: #{_fused_linear.1} parent=1 // pred_fallthru
      _
    // Predicated region
    $region18: #{_fused_linear.1} parent=1 // pred_check
      _
    $region19: #{_fused_linear.1} parent=1 // pred_check_branch
      %24 = sbr.rel (0) target = $region21
    $region20: #{_fused_linear.1} parent=1 // pred_region
      _
    $region21: #{_fused_linear.1} parent=1 // pred_fallthru
      _
    // Predicated region
    $region22: #{_fused_linear.1} parent=1 // pred_check
      _
    $region23: #{_fused_linear.1} parent=1 // pred_check_branch
      %26 = sbr.rel (0) target = $region25
    $region24: #{_fused_linear.1} parent=1 // pred_region
      _
    $region25: #{_fused_linear.1} parent=1 // pred_fallthru
      _
    %v27 = vld [vmem:[%s0] sm:$0xff]
    %v28 = vld [vmem:[%s0 + $0x8] sm:$0xff]
    %v29 = vld [vmem:[%s0 + $0x10] sm:$0xff]
    %v30 = vld [vmem:[%s0 + $0x18] sm:$0xff]
    %v31 = vld [vmem:[%s1] sm:$0xf]
    %33 = vset.pattern.permute.xlu0 0
    %34 = vperm.xlu0 %33, %v27
    %v35 = vpop.permute.xlu0 %34
    %38 = vset.pattern.permute.xlu0 0
    %39 = vperm.xlu0 %38, %v28
    %v40 = vpop.permute.xlu0 %39
    %43 = vset.pattern.permute.xlu0 0
    %44 = vperm.xlu0 %43, %v29
    %v45 = vpop.permute.xlu0 %44
    %48 = vset.pattern.permute.xlu0 0
    %49 = vperm.xlu0 %48, %v30
    %v50 = vpop.permute.xlu0 %49
    %v52 = vlaneseq
    %v53 = vshrl.u32 %v52, 7
    %v54 = vsub.s32 0, %v53
    %v55 = vrot.slane %v31, %v54
    %v56 = vmul.f32 %v35, %v55
    %v57 = vmul.f32 %v40, %v55
    %v58 = vmul.f32 %v45, %v55
    %v59 = vmul.f32 %v50, %v55
    %60 = vset.pattern.permute.xlu0 1
    %61 = vperm.xlu0 %60, %v27
    %v62 = vpop.permute.xlu0 %61
    %64 = vset.pattern.permute.xlu0 1
    %65 = vperm.xlu0 %64, %v28
    %v66 = vpop.permute.xlu0 %65
    %68 = vset.pattern.permute.xlu0 1
    %69 = vperm.xlu0 %68, %v29
    %v70 = vpop.permute.xlu0 %69
    %72 = vset.pattern.permute.xlu0 1
    %73 = vperm.xlu0 %72, %v30
    %v74 = vpop.permute.xlu0 %73
    %v76 = vlaneseq
    %v77 = vshrl.u32 %v76, 7
    %v78 = vsub.s32 1, %v77
    %v79 = vrot.slane %v31, %v78
    %v80 = vmul.f32 %v62, %v79
    %v81 = vmul.f32 %v66, %v79
    %v82 = vmul.f32 %v70, %v79
    %v83 = vmul.f32 %v74, %v79
    %v84 = vadd.f32 %v56, %v80
    %v85 = vadd.f32 %v57, %v81
    %v86 = vadd.f32 %v58, %v82
    %v87 = vadd.f32 %v59, %v83
    %88 = vset.pattern.permute.xlu0 2
    %89 = vperm.xlu0 %88, %v27
    %v90 = vpop.permute.xlu0 %89
    %92 = vset.pattern.permute.xlu0 2
    %93 = vperm.xlu0 %92, %v28
    %v94 = vpop.permute.xlu0 %93
    %96 = vset.pattern.permute.xlu0 2
    %97 = vperm.xlu0 %96, %v29
    %v98 = vpop.permute.xlu0 %97
    %100 = vset.pattern.permute.xlu0 2
    %101 = vperm.xlu0 %100, %v30
    %v102 = vpop.permute.xlu0 %101
    %v104 = vlaneseq
    %v105 = vshrl.u32 %v104, 7
    %v106 = vsub.s32 2, %v105
    %v107 = vrot.slane %v31, %v106
    %v108 = vmul.f32 %v90, %v107
    %v109 = vmul.f32 %v94, %v107
    %v110 = vmul.f32 %v98, %v107
    %v111 = vmul.f32 %v102, %v107
    %v112 = vadd.f32 %v84, %v108
    %v113 = vadd.f32 %v85, %v109
    %v114 = vadd.f32 %v86, %v110
    %v115 = vadd.f32 %v87, %v111
    %116 = vset.pattern.permute.xlu0 3
    %117 = vperm.xlu0 %116, %v27
    %v118 = vpop.permute.xlu0 %117
    %120 = vset.pattern.permute.xlu0 3
    %121 = vperm.xlu0 %120, %v28
    %v122 = vpop.permute.xlu0 %121
    %124 = vset.pattern.permute.xlu0 3
    %125 = vperm.xlu0 %124, %v29
    %v126 = vpop.permute.xlu0 %125
    %128 = vset.pattern.permute.xlu0 3
    %129 = vperm.xlu0 %128, %v30
    %v130 = vpop.permute.xlu0 %129
    %v132 = vlaneseq
    %v133 = vshrl.u32 %v132, 7
    %v134 = vsub.s32 3, %v133
    %v135 = vrot.slane %v31, %v134
    %v136 = vmul.f32 %v118, %v135
    %v137 = vmul.f32 %v122, %v135
    %v138 = vmul.f32 %v126, %v135
    %v139 = vmul.f32 %v130, %v135
    %v140 = vadd.f32 %v112, %v136
    %v141 = vadd.f32 %v113, %v137
    %v142 = vadd.f32 %v114, %v138
    %v143 = vadd.f32 %v115, %v139
    %v144 = vld [vmem:[%s2] sm:$0x1]
    %v146 = vlaneseq
    %v147 = vshrl.u32 %v146, 7
    %v148 = vsub.s32 0, %v147
    %v149 = vrot.slane %v144, %v148
    %v151 = vadd.f32 %v140, %v149
    %v152 = vadd.f32 %v141, %v149
    %v153 = vadd.f32 %v142, %v149
    %v154 = vadd.f32 %v143, %v149
    %v155 = vpack.c.bf16 %v152, %v151
    %v156 = vpack.c.bf16 %v154, %v153
    %v159 = vunpack.c.l.b16 %v155
    %v160 = vunpack.c.h.b16 %v155
    %v161 = vunpack.c.l.b16 %v156
    %v162 = vunpack.c.h.b16 %v156
    %v163 = vpack.c.b16 %v159, %v159
    %v164 = vpack.c.b16 %v160, %v160
    %v165 = vpack.c.b16 %v161, %v161
    %v166 = vpack.c.b16 %v162, %v162
    %171 = vst [vmem:[#allocation2] sm:$0xf] %v163
    %172 = vst [vmem:[#allocation2 + $0x4] sm:$0xf] %v164
    %173 = vst [vmem:[#allocation2 + $0x8] sm:$0xf] %v165
    %174 = vst [vmem:[#allocation2 + $0xc] sm:$0xf] %v166
    %v175 = vld [vmem:[%s5] sm:$0xff]
    %v176 = vld [vmem:[%s5 + $0x8] sm:$0xff]
    %v177 = vld [vmem:[%s5 + $0x10] sm:$0xff]
    %v178 = vld [vmem:[%s5 + $0x18] sm:$0xff]
    %180 = vset.pattern.permute.xlu0 0
    %181 = vperm.xlu0 %180, %v175
    %v182 = vpop.permute.xlu0 %181
    %185 = vset.pattern.permute.xlu0 0
    %186 = vperm.xlu0 %185, %v176
    %v187 = vpop.permute.xlu0 %186
    %190 = vset.pattern.permute.xlu0 0
    %191 = vperm.xlu0 %190, %v177
    %v192 = vpop.permute.xlu0 %191
    %195 = vset.pattern.permute.xlu0 0
    %196 = vperm.xlu0 %195, %v178
    %v197 = vpop.permute.xlu0 %196
    %v199 = vmul.f32 %v151, %v182
    %v200 = vmul.f32 %v152, %v187
    %v201 = vmul.f32 %v153, %v192
    %v202 = vmul.f32 %v154, %v197
    %v203 = vadd.f32 %v199, %v200
    %v204 = vadd.f32 %v203, %v201
    %v205 = vadd.f32 %v204, %v202
    %v206 = vrot.slane %v205, 4
    %v207 = vadd.f32 %v205, %v206
    %v208 = vrot.slane %v207, 2
    %v209 = vadd.f32 %v207, %v208
    %v210 = vrot.slane %v209, 1
    %v211 = vadd.f32 %v209, %v210
    %v212 = vmul.f32 %v199, %v151
    %v213 = vmul.f32 %v200, %v152
    %v214 = vmul.f32 %v201, %v153
    %v215 = vmul.f32 %v202, %v154
    %v216 = vadd.f32 %v212, %v213
    %v217 = vadd.f32 %v216, %v214
    %v218 = vadd.f32 %v217, %v215
    %v219 = vrot.slane %v218, 4
    %v220 = vadd.f32 %v218, %v219
    %v221 = vrot.slane %v220, 2
    %v222 = vadd.f32 %v220, %v221
    %v223 = vrot.slane %v222, 1
    %v224 = vadd.f32 %v222, %v223
    %v225 = vlaneseq
    %v226 = vshrl.u32 %v225, 7
    %vm227 = vcmp.eq.s32.totalorder %v226, 0
    %vm228 = vcmp.eq.s32.totalorder %v226, 1
    %v229 = vsel %vm228, %v224, 0.0
    %v230 = vsel %vm227, %v211, %v229
    %231 = vst [vmem:[#allocation4] sm:$0xff] %v230
    // Predicated region
    $region26: #{_fused_linear.1} parent=1 // pred_check
      _
    $region27: #{_fused_linear.1} parent=1 // pred_check_branch
      %233 = sbr.rel (0) target = $region29
    $region28: #{_fused_linear.1} parent=1 // pred_region
      %s235 = ssub.s32 256, 256
      %236 = vsyncadd [#allocation3], %s235
      %s237 = sshll.u32 [#allocation2], 4
      %s238 = int_to_ptr.vmem [resolvable:$true] %s237
      %243 = dma.vmem_to_hbm [thread:$0]  %s238, 256, %s6, [#allocation3], 64, 64, 4
    $region29: #{_fused_linear.1} parent=1 // pred_fallthru
      _
    // Predicated region
    $region30: #{_fused_linear.1} parent=1 // pred_check
      _
    $region31: #{_fused_linear.1} parent=1 // pred_check_branch
      %245 = sbr.rel (0) target = $region33
    $region32: #{_fused_linear.1} parent=1 // pred_region
      %s247 = ssub.s32 128, 128
      %248 = vsyncadd [#allocation5], %s247
      %s250 = sshll.u32 [#allocation4], 4
      %s251 = int_to_ptr.vmem [resolvable:$true] %s250
      %253 = dma.vmem_to_hbm [thread:$0]  %s251, 128, %s7, [#allocation5]
    $region33: #{_fused_linear.1} parent=1 // pred_fallthru
      _
    // Predicated region
    $region34: #{_fused_linear.1} parent=1 // pred_check
      _
    $region35: #{_fused_linear.1} parent=1 // pred_check_branch
      %255 = sbr.rel (0) target = $region37
    $region36: #{_fused_linear.1} parent=1 // pred_region
      %256 = dma.done [#allocation3], 256
    $region37: #{_fused_linear.1} parent=1 // pred_fallthru
      _
    // Predicated region
    $region38: #{_fused_linear.1} parent=1 // pred_check
      _
    $region39: #{_fused_linear.1} parent=1 // pred_check_branch
      %258 = sbr.rel (0) target = $region41
    $region40: #{_fused_linear.1} parent=1 // pred_region
      %259 = dma.done [#allocation5], 128
    $region41: #{_fused_linear.1} parent=1 // pred_fallthru
      _
    %260 = vsyncpa [#allocation3], 1
    %261 = vsyncpa [#allocation5], 1

</llo_original>
